<compile_context>
chip_gen: v7x
topology: tpu7x:2x2x1
jax: 0.10.0
libtpu: 0.0.40
codegen_flags: <defaults>
</compile_context>

<pallas_src>
import functools

import jax
import jax.numpy as jnp
from jax.experimental import pallas as pl
from jax.experimental.pallas import tpu as pltpu


def _round_up(x, m):
    return ((x + m - 1) // m) * m


def _vmem_capacity_bytes():
    """Generation-aware VMEM capacity (v5e/v6e: 128 MiB, v7x: 64 MiB/TC)."""
    try:
        info = pltpu.get_tpu_info()
        cap = getattr(info, "vmem_capacity_bytes", None)
        if cap:
            return int(cap)
    except Exception:
        pass
    return 64 << 20  # conservative fallback (v7x-sized)


def _rope_kernel(pos_ref, inv_ref, cos_ref, sin_ref, *, pack, attention_scaling):
    # pos_ref: (tr, k) positions (any numeric dtype); inv_ref: (k, W) f32 where
    # row j holds cat(inv_freq, inv_freq) tiled into lane-group j and zeros
    # elsewhere (W = k * dim).  emb[:, c] = pos[:, c // dim] * inv_full[c % dim].
    pos = pos_ref[...].astype(jnp.float32)            # (tr, k)
    inv = inv_ref[...]                                 # (k, W) f32
    emb = pos[:, 0:1] * inv[0:1, :]                    # (tr, W)
    for j in range(1, pack):                           # static, pack <= 4
        emb = emb + pos[:, j:j + 1] * inv[j:j + 1, :]
    cos = jnp.cos(emb)
    sin = jnp.sin(emb)
    if attention_scaling != 1.0:                       # Python-level gate
        cos = cos * attention_scaling
        sin = sin * attention_scaling
    cos_ref[...] = cos.astype(cos_ref.dtype)
    sin_ref[...] = sin.astype(sin_ref.dtype)


def qwen2_navit_rotary_embedding(x, position_ids, inv_freq,
                                 attention_scaling=1.0, *, row_tile=8192):
    """Returns (cos, sin) of shape (batch, seq, dim) in x.dtype.

    x:            only its dtype is used (matches the torch module).
    position_ids: (batch, seq) integer or float positions.
    inv_freq:     (dim//2,) inverse frequencies.
    """
    out_dtype = x.dtype
    batch, seq = position_ids.shape
    half_dim = inv_freq.shape[0]
    dim = 2 * half_dim
    rows = batch * seq

    # ---- Row packing: make the output last dim a multiple of 128 lanes ------
    if dim < 128 and (128 % dim == 0) and (rows % (128 // dim) == 0):
        k = 128 // dim
    else:
        k = 1
    W = k * dim
    rows_p = rows // k

    # emb = cat(freqs, freqs) == pos * cat(inv_freq, inv_freq); build a (k, W)
    # table whose row j carries that vector in lane-group j (zeros elsewhere).
    inv_full = jnp.concatenate([inv_freq, inv_freq]).astype(jnp.float32)    # (dim,)
    inv_tiled = jnp.tile(inv_full, k)                                       # (W,)
    group = jnp.arange(W, dtype=jnp.int32) // dim                           # (W,)
    inv_g = jnp.where(group[None, :] == jnp.arange(k, dtype=jnp.int32)[:, None],
                      inv_tiled[None, :], 0.0).astype(jnp.float32)          # (k, W)

    # Keep positions in their original dtype (kernel casts); reshape is free.
    pos2d = position_ids.reshape(rows_p, k)

    out_isz = jnp.dtype(out_dtype).itemsize
    pos_isz = jnp.dtype(pos2d.dtype).itemsize

    def block_bytes(t):
        # pos tile + inv table + cos tile + sin tile (single buffer each)
        return t * k * pos_isz + k * W * 4 + 2 * t * W * out_isz

    vmem_cap = _vmem_capacity_bytes()
    budget = int(vmem_cap * 0.70)          # double-buffered live blocks budget

    # ---- Row tile selection --------------------------------------------------
    if rows_p <= 8:
        tr = rows_p                         # block == full array dim (allowed)
    else:
        tr = min(int(row_tile), _round_up(rows_p, 8))
        tr = max(8, (tr // 8) * 8)          # multiple of 8 sublanes
        while tr > 8 and 2 * block_bytes(tr) > budget:
            tr = max(8, _round_up(tr // 2, 8))
        # Guarantee >= 2 grid steps so the "parallel" axis can be split across
        # the two TensorCores on v7x.
        if pl.cdiv(rows_p, tr) < 2:
            tr = max(8, _round_up(pl.cdiv(rows_p, 2), 8))

    grid = (pl.cdiv(rows_p, tr),)           # no padding; Pallas clips the ragged tail

    vmem_limit = int(min(max(2 * block_bytes(tr) + (4 << 20), 32 << 20),
                         int(vmem_cap * 0.90)))

    cos2d, sin2d = pl.pallas_call(
        functools.partial(_rope_kernel, pack=k,
                          attention_scaling=float(attention_scaling)),
        out_shape=(
            jax.ShapeDtypeStruct((rows_p, W), out_dtype),
            jax.ShapeDtypeStruct((rows_p, W), out_dtype),
        ),
        grid_spec=pltpu.PrefetchScalarGridSpec(
            num_scalar_prefetch=0,
            grid=grid,
            in_specs=[
                pl.BlockSpec((tr, k), lambda i: (i, 0)),   # packed positions
                pl.BlockSpec((k, W), lambda i: (0, 0)),    # masked inv table
            ],
            out_specs=[
                pl.BlockSpec((tr, W), lambda i: (i, 0)),   # cos
                pl.BlockSpec((tr, W), lambda i: (i, 0)),   # sin
            ],
        ),
        compiler_params=pltpu.CompilerParams(
            dimension_semantics=("parallel",),
            vmem_limit_bytes=vmem_limit,
        ),
    )(pos2d, inv_g)

    # rows_p * W == rows * dim, so this reshape is a free bitcast (no HBM copy).
    cos = cos2d.reshape(batch, seq, dim)
    sin = sin2d.reshape(batch, seq, dim)
    return cos, sin


def rope_reference(x, position_ids, inv_freq, attention_scaling=1.0):
    """Pure-JAX reference matching the torch forward."""
    pos = position_ids.astype(jnp.float32)                                    # (B, S)
    freqs = pos[..., None] * inv_freq.astype(jnp.float32)[None, None, :]      # (B, S, D/2)
    emb = jnp.concatenate([freqs, freqs], axis=-1)                            # (B, S, D)
    cos = (jnp.cos(emb) * attention_scaling).astype(x.dtype)
    sin = (jnp.sin(emb) * attention_scaling).astype(x.dtype)
    return cos, sin


def _check(name, x, position_ids, inv_freq, attention_scaling, atol):
    cos, sin = qwen2_navit_rotary_embedding(x, position_ids, inv_freq,
                                            attention_scaling)
    cos, sin = jax.block_until_ready((cos, sin))
    cos_ref, sin_ref = rope_reference(x, position_ids, inv_freq, attention_scaling)
    dim = 2 * inv_freq.shape[0]
    assert cos.shape == position_ids.shape + (dim,), (name, cos.shape)
    assert sin.shape == position_ids.shape + (dim,), (name, sin.shape)
    assert cos.dtype == x.dtype and sin.dtype == x.dtype, (name, cos.dtype)
    dc = float(jnp.max(jnp.abs(cos.astype(jnp.float32) - cos_ref.astype(jnp.float32))))
    ds = float(jnp.max(jnp.abs(sin.astype(jnp.float32) - sin_ref.astype(jnp.float32))))
    assert dc <= atol, (name, "cos max abs diff", dc)
    assert ds <= atol, (name, "sin max abs diff", ds)


if __name__ == "__main__":
    base = 10000.0
    attention_scaling = 1.0  # 'default' rope type
    key = jax.random.PRNGKey(0)
    k1, k2, k3, k4, k5 = jax.random.split(key, 5)

    def make_inv_freq(head_dim):
        return 1.0 / (base ** (jnp.arange(0, head_dim, 2, dtype=jnp.float32) / head_dim))

    # Case 1: packed path (dim=32 -> 4 rows per 128-lane output row), f32 out.
    batch, seq, head_dim, hidden = 2, 8, 32, 64
    x = jax.random.normal(k1, (batch, seq, hidden), dtype=jnp.float32)
    pos = jax.random.randint(k2, (batch, seq), 0, 256, dtype=jnp.int32)
    _check("packed_f32", x, pos, make_inv_freq(head_dim), attention_scaling, atol=3e-5)

    # Case 2: packed path with a ragged final grid block (rows_p not a tile multiple).
    batch, seq, head_dim, hidden = 2, 36, 32, 64
    x = jax.random.normal(k3, (batch, seq, hidden), dtype=jnp.float32)
    pos = jax.random.randint(k4, (batch, seq), 0, 256, dtype=jnp.int32)
    _check("packed_ragged", x, pos, make_inv_freq(head_dim), attention_scaling, atol=3e-5)

    # Case 3: dim=128 (no packing, already lane-dense), bf16 output dtype.
    batch, seq, head_dim, hidden = 2, 8, 128, 128
    x = jax.random.normal(k5, (batch, seq, hidden), dtype=jnp.bfloat16)
    pos = jnp.arange(batch * seq, dtype=jnp.int32).reshape(batch, seq)
    _check("dense_bf16", x, pos, make_inv_freq(head_dim), attention_scaling, atol=1e-2)

    # Case 4: fallback (rows not divisible by the pack factor) -> narrow output, still correct.
    batch, seq, head_dim, hidden = 1, 9, 32, 64
    x = jax.random.normal(k1, (batch, seq, hidden), dtype=jnp.float32)
    pos = jax.random.randint(k2, (batch, seq), 0, 256, dtype=jnp.int32)
    _check("narrow_fallback", x, pos, make_inv_freq(head_dim), attention_scaling, atol=3e-5)

    print("KERNEL_OK")
</pallas_src>

<mosaic_0001>
module attributes {stable_mosaic.version = 11 : i64} {
  func.func @_rope_kernel(%arg0: i32, %arg1: memref<4x4xi32, #tpu.memory_space<vmem>>, %arg2: memref<4x128xf32, #tpu.memory_space<vmem>>, %arg3: memref<4x128xf32, #tpu.memory_space<vmem>>, %arg4: memref<4x128xf32, #tpu.memory_space<vmem>>) attributes {dimension_semantics = [#tpu.dimension_semantics<parallel>], iteration_bounds = array<i64: 1>, scalar_prefetch = 0 : i64, scratch_operands = 0 : i64, tpu.core_type = #tpu.core_type<tc>, window_params = [{transform_indices = @transform_0, window_bounds = array<i64: 4, 4>}, {pipeline_mode = #tpu.pipeline_mode<synchronous>, transform_indices = @transform_1, window_bounds = array<i64: 4, 128>}, {transform_indices = @transform_2, window_bounds = array<i64: 4, 128>}, {transform_indices = @transform_3, window_bounds = array<i64: 4, 128>}]} {
    %c0 = arith.constant 0 : index
    %c0_0 = arith.constant 0 : index
    %0 = vector.load %arg1[%c0, %c0_0] : memref<4x4xi32, #tpu.memory_space<vmem>>, vector<4x4xi32>
    %1 = arith.sitofp %0 : vector<4x4xi32> to vector<4x4xf32>
    %c0_1 = arith.constant 0 : index
    %c0_2 = arith.constant 0 : index
    %2 = vector.load %arg2[%c0_1, %c0_2] : memref<4x128xf32, #tpu.memory_space<vmem>>, vector<4x128xf32>
    %3 = vector.extract_strided_slice %1 {offsets = [0, 0], sizes = [4, 1], strides = [1, 1]} : vector<4x4xf32> to vector<4x1xf32>
    %4 = vector.extract_strided_slice %2 {offsets = [0, 0], sizes = [1, 128], strides = [1, 1]} : vector<4x128xf32> to vector<1x128xf32>
    %5 = vector.broadcast %3 : vector<4x1xf32> to vector<4x128xf32>
    %6 = vector.broadcast %4 : vector<1x128xf32> to vector<4x128xf32>
    %7 = arith.mulf %5, %6 : vector<4x128xf32>
    %8 = vector.extract_strided_slice %1 {offsets = [0, 1], sizes = [4, 1], strides = [1, 1]} : vector<4x4xf32> to vector<4x1xf32>
    %9 = vector.extract_strided_slice %2 {offsets = [1, 0], sizes = [1, 128], strides = [1, 1]} : vector<4x128xf32> to vector<1x128xf32>
    %10 = vector.broadcast %8 : vector<4x1xf32> to vector<4x128xf32>
    %11 = vector.broadcast %9 : vector<1x128xf32> to vector<4x128xf32>
    %12 = arith.mulf %10, %11 : vector<4x128xf32>
    %13 = arith.addf %7, %12 : vector<4x128xf32>
    %14 = vector.extract_strided_slice %1 {offsets = [0, 2], sizes = [4, 1], strides = [1, 1]} : vector<4x4xf32> to vector<4x1xf32>
    %15 = vector.extract_strided_slice %2 {offsets = [2, 0], sizes = [1, 128], strides = [1, 1]} : vector<4x128xf32> to vector<1x128xf32>
    %16 = vector.broadcast %14 : vector<4x1xf32> to vector<4x128xf32>
    %17 = vector.broadcast %15 : vector<1x128xf32> to vector<4x128xf32>
    %18 = arith.mulf %16, %17 : vector<4x128xf32>
    %19 = arith.addf %13, %18 : vector<4x128xf32>
    %20 = vector.extract_strided_slice %1 {offsets = [0, 3], sizes = [4, 1], strides = [1, 1]} : vector<4x4xf32> to vector<4x1xf32>
    %21 = vector.extract_strided_slice %2 {offsets = [3, 0], sizes = [1, 128], strides = [1, 1]} : vector<4x128xf32> to vector<1x128xf32>
    %22 = vector.broadcast %20 : vector<4x1xf32> to vector<4x128xf32>
    %23 = vector.broadcast %21 : vector<1x128xf32> to vector<4x128xf32>
    %24 = arith.mulf %22, %23 : vector<4x128xf32>
    %25 = arith.addf %19, %24 : vector<4x128xf32>
    %26 = math.cos %25 : vector<4x128xf32>
    %27 = math.sin %25 : vector<4x128xf32>
    %c0_3 = arith.constant 0 : index
    %c0_4 = arith.constant 0 : index
    %28 = vector.load %arg3[%c0_3, %c0_4] : memref<4x128xf32, #tpu.memory_space<vmem>>, vector<4x128xf32>
    tpu.vector_store %arg3[%c0_3, %c0_4], %26 {strides = array<i32>} : memref<4x128xf32, #tpu.memory_space<vmem>>, vector<4x128xf32>,
    %c0_5 = arith.constant 0 : index
    %c0_6 = arith.constant 0 : index
    %29 = vector.load %arg4[%c0_5, %c0_6] : memref<4x128xf32, #tpu.memory_space<vmem>>, vector<4x128xf32>
    tpu.vector_store %arg4[%c0_5, %c0_6], %27 {strides = array<i32>} : memref<4x128xf32, #tpu.memory_space<vmem>>, vector<4x128xf32>,
    return
  }
  func.func @transform_0(%arg0: i32) -> (i32, i32) {
    %c0_i32 = arith.constant 0 : i32
    %c0_i32_0 = arith.constant 0 : i32
    return %arg0, %c0_i32 : i32, i32
  }
  func.func @transform_1(%arg0: i32) -> (i32, i32) {
    %c0_i32 = arith.constant 0 : i32
    %c0_i32_0 = arith.constant 0 : i32
    %c0_i32_1 = arith.constant 0 : i32
    return %c0_i32, %c0_i32_0 : i32, i32
  }
  func.func @transform_2(%arg0: i32) -> (i32, i32) {
    %c0_i32 = arith.constant 0 : i32
    %c0_i32_0 = arith.constant 0 : i32
    return %arg0, %c0_i32 : i32, i32
  }
  func.func @transform_3(%arg0: i32) -> (i32, i32) {
    %c0_i32 = arith.constant 0 : i32
    %c0_i32_0 = arith.constant 0 : i32
    return %arg0, %c0_i32 : i32, i32
  }
}

</mosaic_0001>

<llo_original>
// kernel: tpu_custom_call.1
$region0: #{tpu_custom_call.1}
  #allocation0 [shape = 'u32[]', space=smem, size = 0x4, offset = 0x4, fixed_abs, tag = 'smem constant byte address 0x4 - core index']
  #allocation1 [shape = 'u32[144,128]{1,0:T(1,128)}', space=vmem, size = 0x12000, scoped, tag = 'internal scratch']
  %s0 = inlined_call_operand.hbm [shape: s32[4,4], index: 0, kind: input, shape index: {}]
  %s1 = inlined_call_operand.hbm [shape: f32[4,128], index: 1, kind: input, shape index: {}]
  %s2 = inlined_call_operand.hbm [shape: f32[4,128], index: 2, kind: output, shape index: {0}]
  %s3 = inlined_call_operand.hbm [shape: f32[4,128], index: 3, kind: output, shape index: {1}]
  %4 = xla_tuple %s2, %s3
  %s5 = sld [smem:[#allocation0]]
  $region34: #{tpu_custom_call.1} parent=0
    _
  %s7 = ssub.s32 1, %s5
  %s8 = scalar_select 0, %s7, %s5
  $region1: #{tpu_custom_call.1} parent=0
    #allocation2 [shape = 'u8[2048]{0}', space=vmem, size = 0x800, scoped, tag = 'input window, operand 0, single buffered']
    #allocation3 [shape = 's32[1]{0}', space=sflag, size = 0x4, scoped, tag = 'scoped memory for tpu_custom_call.1']
    #allocation4 [shape = 's32[1]{0}', space=sflag, size = 0x4, scoped, tag = 'scoped memory for tpu_custom_call.1']
    #allocation5 [shape = 'u8[2048]{0}', space=vmem, size = 0x800, scoped, tag = 'input window, operand 1, single buffered']
    #allocation6 [shape = 's32[1]{0}', space=sflag, size = 0x4, scoped, tag = 'scoped memory for tpu_custom_call.1']
    #allocation7 [shape = 'u8[2048]{0}', space=vmem, size = 0x800, scoped, tag = 'output window, operand 0, single buffered']
    #allocation8 [shape = 'u8[2048]{0}', space=vmem, size = 0x800, scoped, tag = 'output window, operand 1, single buffered']
    #allocation9 [shape = 's32[1]{0}', space=sflag, size = 0x4, scoped, tag = 'scoped memory for tpu_custom_call.1']
    %9 = vsyncpa [#allocation3], 0
    %10 = vsyncpa [#allocation6], 0
    %11 = vsyncpa [#allocation4], 0
    %12 = vsyncpa [#allocation9], 0
    // Predicated region
    $region2: #{tpu_custom_call.1} parent=1 // pred_check
      _
    $region3: #{tpu_custom_call.1} parent=1 // pred_check_branch
      %14 = sbr.rel (0) target = $region5
    $region4: #{tpu_custom_call.1} parent=1 // pred_region
      %s16 = ssub.s32 64, 64
      %17 = vsyncadd [#allocation3], %s16
      %s19 = sshll.u32 [#allocation2], 4
      %s20 = int_to_ptr.vmem [resolvable:$true] %s19
      %22 = dma.hbm_to_vmem [thread:$0]  %s0, 64, %s20, [#allocation3]
    $region5: #{tpu_custom_call.1} parent=1 // pred_fallthru
      _
    // Predicated region
    $region6: #{tpu_custom_call.1} parent=1 // pred_check
      _
    $region7: #{tpu_custom_call.1} parent=1 // pred_check_branch
      %24 = sbr.rel (0) target = $region9
    $region8: #{tpu_custom_call.1} parent=1 // pred_region
      %s26 = ssub.s32 64, 64
      %27 = vsyncadd [#allocation6], %s26
      %s29 = sshll.u32 [#allocation5], 4
      %s30 = int_to_ptr.vmem [resolvable:$true] %s29
      %32 = dma.hbm_to_vmem [thread:$0]  %s1, 64, %s30, [#allocation6]
    $region9: #{tpu_custom_call.1} parent=1 // pred_fallthru
      _
    // Predicated region
    $region10: #{tpu_custom_call.1} parent=1 // pred_check
      _
    $region11: #{tpu_custom_call.1} parent=1 // pred_check_branch
      %34 = sbr.rel (0) target = $region13
    $region12: #{tpu_custom_call.1} parent=1 // pred_region
      %35 = dma.done [#allocation3], 64
    $region13: #{tpu_custom_call.1} parent=1 // pred_fallthru
      _
    // Predicated region
    $region14: #{tpu_custom_call.1} parent=1 // pred_check
      _
    $region15: #{tpu_custom_call.1} parent=1 // pred_check_branch
      %37 = sbr.rel (0) target = $region17
    $region16: #{tpu_custom_call.1} parent=1 // pred_region
      %38 = dma.done [#allocation6], 64
    $region17: #{tpu_custom_call.1} parent=1 // pred_fallthru
      _
    %v39 = vld [vmem:[#allocation2] sm:$0xf]
    %v40 = vcvt.s32.f32 %v39
    %v41 = vld [vmem:[#allocation5] sm:$0xf]
    %43 = vset.pattern.permute.xlu0 0
    %44 = vperm.xlu0 %43, %v40
    %v45 = vpop.permute.xlu0 %44
    %v47 = vlaneseq
    %v48 = vshrl.u32 %v47, 7
    %v49 = vsub.s32 0, %v48
    %v50 = vrot.slane %v41, %v49
    %v51 = vmul.f32 %v45, %v50
    %52 = vset.pattern.permute.xlu0 1
    %53 = vperm.xlu0 %52, %v40
    %v54 = vpop.permute.xlu0 %53
    %v56 = vlaneseq
    %v57 = vshrl.u32 %v56, 7
    %v58 = vsub.s32 1, %v57
    %v59 = vrot.slane %v41, %v58
    %v60 = vmul.f32 %v54, %v59
    %v61 = vadd.f32 %v51, %v60
    %62 = vset.pattern.permute.xlu0 2
    %63 = vperm.xlu0 %62, %v40
    %v64 = vpop.permute.xlu0 %63
    %v66 = vlaneseq
    %v67 = vshrl.u32 %v66, 7
    %v68 = vsub.s32 2, %v67
    %v69 = vrot.slane %v41, %v68
    %v70 = vmul.f32 %v64, %v69
    %v71 = vadd.f32 %v61, %v70
    %72 = vset.pattern.permute.xlu0 3
    %73 = vperm.xlu0 %72, %v40
    %v74 = vpop.permute.xlu0 %73
    %v76 = vlaneseq
    %v77 = vshrl.u32 %v76, 7
    %v78 = vsub.s32 3, %v77
    %v79 = vrot.slane %v41, %v78
    %v80 = vmul.f32 %v74, %v79
    %v81 = vadd.f32 %v71, %v80
    %v82 = vand.u32 2147483647, %v81
    %vm83 = vcmp.le.f32.partialorder %v82, 0.7853982
    %vm84 = vcmp.lt.s32.totalorder %v81, 0
    %v85 = vand.u32 %v81, 2139095040
    %v86 = vshrl.u32 %v85, 23
    %v87 = vsub.s32 %v86, 127
    %v88 = vand.u32 2147483647, %v81
    %v89 = vand.u32 %v88, 8388607
    %v90 = vor.u32 %v89, 8388608
    %v91 = vsub.s32 0, %v90
    %v92 = vadd.s32 %v87, 1
    %vm93 = vcmp.gt.s32.totalorder %v92, 0
    %v94 = vsel %vm93, %v92, 0
    %v95 = vshrl.u32 %v94, 5
    %v96 = vand.u32 %v94, 31
    %v97 = vsub.s32 32, %v96
    %v98 = vshrl.u32 683565275, %v97
    %v99 = vshll.u32 683565275, %v96
    %v100 = vshrl.u32 2475754826, %v97
    %v101 = vor.u32 %v99, %v100
    %v102 = vshll.u32 2475754826, %v96
    %v103 = vshrl.u32 2131351028, %v97
    %v104 = vor.u32 %v102, %v103
    %v105 = vshll.u32 2131351028, %v96
    %v106 = vshrl.u32 2102212464, %v97
    %v107 = vor.u32 %v105, %v106
    %v108 = vshll.u32 2102212464, %v96
    %v109 = vshrl.u32 920167782, %v97
    %v110 = vor.u32 %v108, %v109
    %v111 = vshll.u32 920167782, %v96
    %v112 = vshrl.u32 1326507024, %v97
    %v113 = vor.u32 %v111, %v112
    %vm114 = vcmp.lt.s32.totalorder %v95, 1
    %vm115 = vcmp.lt.s32.totalorder %v95, 2
    %vm116 = vcmp.lt.s32.totalorder %v95, 3
    %vm117 = vcmp.lt.s32.totalorder %v95, 4
    %v118 = vsel %vm114, %v98, %v101
    %v119 = vsel %vm117, %v107, 2102212464
    %v120 = vsel %vm116, %v104, %v119
    %v121 = vsel %vm115, %v118, %v120
    %v122 = vsel %vm114, %v101, %v104
    %v123 = vsel %vm117, %v110, 920167782
    %v124 = vsel %vm116, %v107, %v123
    %v125 = vsel %vm115, %v122, %v124
    %v126 = vsel %vm114, %v104, %v107
    %v127 = vsel %vm117, %v113, 1326507024
    %v128 = vsel %vm116, %v110, %v127
    %v129 = vsel %vm115, %v126, %v128
    %v130 = vshll.u32 %v90, 8
    %v131 = vmul.u32.u64.compose %v130, %v129
    %v132 = vextract.low.u32 %v131
    %v133 = vextract.high.u32 %v131
    %v134 = vmul.u32.u64.compose %v130, %v125
    %v135 = vextract.low.u32 %v134
    %v136 = vextract.high.u32 %v134
    %v137 = vmul.u32 %v130, %v121
    %v138 = vadd.s32 %v133, %v135
    %vm139 = vc.u32 %v133, %v135
    %v140 = vadd.s32 %v136, 1
    %v141 = vsel %vm139, %v140, %v136
    %v142 = vadd.s32 %v137, %v141
    %v143 = vadd.s32 %v142, 536870912
    %v144 = vshrl.u32 %v143, 30
    %v145 = vshll.u32 %v144, 30
    %v146 = vsub.s32 %v142, %v145
    %vm147 = vcmp.lt.s32.totalorder %v146, 0
    %v148 = vsub.s32 0, %v146
    %v149 = vsel %vm147, %v148, %v146
    %v150 = vclz %v149
    %v151 = vsub.s32 %v150, 2
    %vm152 = vcmp.gt.s32.totalorder 0, %v151
    %v153 = vsel %vm152, 0, %v151
    %v154 = vsub.s32 32, %v153
    %v155 = vshll.u32 %v146, %v153
    %v156 = vshrl.u32 %v138, %v154
    %v157 = vor.u32 %v155, %v156
    %v158 = vsub.s32 4294967266, %v153
    %v159 = vadd.s32 %v158, 127
    %v160 = vshll.u32 %v159, 23
    %v161 = vor.u32 4788187, %v160
    %v162 = vand.u32 2147483647, %v161
    %v164 = vcvt.s32.f32 %v157
    %v165 = vmul.f32 %v164, %v162
    %v166 = vxor.u32 %v165, 2147483648
    %v167 = vsel %vm84, %v166, %v165
    %v168 = vsub.s32 4, %v144
    %v169 = vsel %vm84, %v168, %v144
    %v170 = vsel %vm83, %v81, %v167
    %v171 = vsel %vm83, 0, %v169
    %v172 = vcosq.f32.pop %v170
    %v173 = vsinq.f32.pop %v170
    %vm174 = vweird.f32 %v81
    %v175 = vand.u32 %v171, 3
    %vm176 = vcmp.lt.s32.totalorder %v175, 2
    %vm177 = vcmp.eq.s32.totalorder %v175, 0
    %v178 = vxor.u32 %v173, 2147483648
    %v179 = vsel %vm177, %v172, %v178
    %vm180 = vcmp.eq.s32.totalorder %v175, 2
    %v181 = vxor.u32 %v172, 2147483648
    %v182 = vsel %vm180, %v181, %v173
    %v183 = vsel %vm176, %v179, %v182
    %v184 = vsel %vm174, nan, %v183
    %v185 = vand.u32 2147483647, %v81
    %vm186 = vcmp.le.f32.partialorder %v185, 0.7853982
    %vm187 = vcmp.lt.s32.totalorder %v81, 0
    %v188 = vand.u32 %v81, 2139095040
    %v189 = vshrl.u32 %v188, 23
    %v190 = vsub.s32 %v189, 127
    %v191 = vand.u32 2147483647, %v81
    %v192 = vand.u32 %v191, 8388607
    %v193 = vor.u32 %v192, 8388608
    %v194 = vsub.s32 0, %v193
    %v195 = vadd.s32 %v190, 1
    %vm196 = vcmp.gt.s32.totalorder %v195, 0
    %v197 = vsel %vm196, %v195, 0
    %v198 = vshrl.u32 %v197, 5
    %v199 = vand.u32 %v197, 31
    %v200 = vsub.s32 32, %v199
    %v201 = vshrl.u32 683565275, %v200
    %v202 = vshll.u32 683565275, %v199
    %v203 = vshrl.u32 2475754826, %v200
    %v204 = vor.u32 %v202, %v203
    %v205 = vshll.u32 2475754826, %v199
    %v206 = vshrl.u32 2131351028, %v200
    %v207 = vor.u32 %v205, %v206
    %v208 = vshll.u32 2131351028, %v199
    %v209 = vshrl.u32 2102212464, %v200
    %v210 = vor.u32 %v208, %v209
    %v211 = vshll.u32 2102212464, %v199
    %v212 = vshrl.u32 920167782, %v200
    %v213 = vor.u32 %v211, %v212
    %v214 = vshll.u32 920167782, %v199
    %v215 = vshrl.u32 1326507024, %v200
    %v216 = vor.u32 %v214, %v215
    %vm217 = vcmp.lt.s32.totalorder %v198, 1
    %vm218 = vcmp.lt.s32.totalorder %v198, 2
    %vm219 = vcmp.lt.s32.totalorder %v198, 3
    %vm220 = vcmp.lt.s32.totalorder %v198, 4
    %v221 = vsel %vm217, %v201, %v204
    %v222 = vsel %vm220, %v210, 2102212464
    %v223 = vsel %vm219, %v207, %v222
    %v224 = vsel %vm218, %v221, %v223
    %v225 = vsel %vm217, %v204, %v207
    %v226 = vsel %vm220, %v213, 920167782
    %v227 = vsel %vm219, %v210, %v226
    %v228 = vsel %vm218, %v225, %v227
    %v229 = vsel %vm217, %v207, %v210
    %v230 = vsel %vm220, %v216, 1326507024
    %v231 = vsel %vm219, %v213, %v230
    %v232 = vsel %vm218, %v229, %v231
    %v233 = vshll.u32 %v193, 8
    %v234 = vmul.u32.u64.compose %v233, %v232
    %v235 = vextract.low.u32 %v234
    %v236 = vextract.high.u32 %v234
    %v237 = vmul.u32.u64.compose %v233, %v228
    %v238 = vextract.low.u32 %v237
    %v239 = vextract.high.u32 %v237
    %v240 = vmul.u32 %v233, %v224
    %v241 = vadd.s32 %v236, %v238
    %vm242 = vc.u32 %v236, %v238
    %v243 = vadd.s32 %v239, 1
    %v244 = vsel %vm242, %v243, %v239
    %v245 = vadd.s32 %v240, %v244
    %v246 = vadd.s32 %v245, 536870912
    %v247 = vshrl.u32 %v246, 30
    %v248 = vshll.u32 %v247, 30
    %v249 = vsub.s32 %v245, %v248
    %vm250 = vcmp.lt.s32.totalorder %v249, 0
    %v251 = vsub.s32 0, %v249
    %v252 = vsel %vm250, %v251, %v249
    %v253 = vclz %v252
    %v254 = vsub.s32 %v253, 2
    %vm255 = vcmp.gt.s32.totalorder 0, %v254
    %v256 = vsel %vm255, 0, %v254
    %v257 = vsub.s32 32, %v256
    %v258 = vshll.u32 %v249, %v256
    %v259 = vshrl.u32 %v241, %v257
    %v260 = vor.u32 %v258, %v259
    %v261 = vsub.s32 4294967266, %v256
    %v262 = vadd.s32 %v261, 127
    %v263 = vshll.u32 %v262, 23
    %v264 = vor.u32 4788187, %v263
    %v265 = vand.u32 2147483647, %v264
    %v267 = vcvt.s32.f32 %v260
    %v268 = vmul.f32 %v267, %v265
    %v269 = vxor.u32 %v268, 2147483648
    %v270 = vsel %vm187, %v269, %v268
    %v271 = vsub.s32 4, %v247
    %v272 = vsel %vm187, %v271, %v247
    %v273 = vsel %vm186, %v81, %v270
    %v274 = vsel %vm186, 0, %v272
    %v275 = vcosq.f32.pop %v273
    %v276 = vsinq.f32.pop %v273
    %vm277 = vweird.f32 %v81
    %v278 = vadd.s32 %v274, 3
    %v279 = vand.u32 %v278, 3
    %vm280 = vcmp.lt.s32.totalorder %v279, 2
    %vm281 = vcmp.eq.s32.totalorder %v279, 0
    %v282 = vxor.u32 %v276, 2147483648
    %v283 = vsel %vm281, %v275, %v282
    %vm284 = vcmp.eq.s32.totalorder %v279, 2
    %v285 = vxor.u32 %v275, 2147483648
    %v286 = vsel %vm284, %v285, %v276
    %v287 = vsel %vm280, %v283, %v286
    %v288 = vsel %vm277, nan, %v287
    %289 = vst [vmem:[#allocation7] sm:$0xf] %v184
    %290 = vst [vmem:[#allocation8] sm:$0xf] %v288
    // Predicated region
    $region18: #{tpu_custom_call.1} parent=1 // pred_check
      _
    $region19: #{tpu_custom_call.1} parent=1 // pred_check_branch
      %292 = sbr.rel (0) target = $region21
    $region20: #{tpu_custom_call.1} parent=1 // pred_region
      %s294 = ssub.s32 64, 64
      %295 = vsyncadd [#allocation4], %s294
      %s297 = sshll.u32 [#allocation7], 4
      %s298 = int_to_ptr.vmem [resolvable:$true] %s297
      %300 = dma.vmem_to_hbm [thread:$0]  %s298, 64, %s2, [#allocation4]
    $region21: #{tpu_custom_call.1} parent=1 // pred_fallthru
      _
    // Predicated region
    $region22: #{tpu_custom_call.1} parent=1 // pred_check
      _
    $region23: #{tpu_custom_call.1} parent=1 // pred_check_branch
      %302 = sbr.rel (0) target = $region25
    $region24: #{tpu_custom_call.1} parent=1 // pred_region
      %s304 = ssub.s32 64, 64
      %305 = vsyncadd [#allocation9], %s304
      %s307 = sshll.u32 [#allocation8], 4
      %s308 = int_to_ptr.vmem [resolvable:$true] %s307
      %310 = dma.vmem_to_hbm [thread:$0]  %s308, 64, %s3, [#allocation9]
    $region25: #{tpu_custom_call.1} parent=1 // pred_fallthru
      _
    // Predicated region
    $region26: #{tpu_custom_call.1} parent=1 // pred_check
      _
    $region27: #{tpu_custom_call.1} parent=1 // pred_check_branch
      %312 = sbr.rel (0) target = $region29
    $region28: #{tpu_custom_call.1} parent=1 // pred_region
      %313 = dma.done [#allocation4], 64
    $region29: #{tpu_custom_call.1} parent=1 // pred_fallthru
      _
    // Predicated region
    $region30: #{tpu_custom_call.1} parent=1 // pred_check
      _
    $region31: #{tpu_custom_call.1} parent=1 // pred_check_branch
      %315 = sbr.rel (0) target = $region33
    $region32: #{tpu_custom_call.1} parent=1 // pred_region
      %316 = dma.done [#allocation9], 64
    $region33: #{tpu_custom_call.1} parent=1 // pred_fallthru
      _
    %317 = vsyncpa [#allocation3], 1
    %318 = vsyncpa [#allocation6], 1
    %319 = vsyncpa [#allocation4], 1
    %320 = vsyncpa [#allocation9], 1

</llo_original>
